<compile_context>
chip_gen: v7x
topology: tpu7x:2x2x1
jax: 0.10.0
libtpu: 0.0.40
codegen_flags: <defaults>
</compile_context>

<pallas_src>
import jax
import jax.numpy as jnp
from jax.experimental import pallas as pl
from jax.experimental.pallas import tpu as pltpu  # noqa: F401  (kept for TPU-specific tuning hooks)


def _extractor_kernel(x_ref, w_ref, b_ref, o_ref):
    # x_ref: [2B, K]   (f1 stacked on top of f0)
    # w_ref: [K, H]    (transposed Linear weight)
    # b_ref: [1, H]
    # o_ref: [2B, H]
    x = x_ref[...]
    w = w_ref[...]
    k = x.shape[1]

    # K is tiny (3): unrolled VPU FMAs instead of an MXU matmul — avoids systolic
    # fill/drain + result-FIFO latency for a <1%-utilization contraction.
    acc = b_ref[...]  # broadcasts [1, H] -> [2B, H] on first add
    for j in range(k):
        acc = acc + x[:, j:j + 1] * w[j:j + 1, :]
    o_ref[...] = acc


def extractor_forward(f1, f0, w_t, b):
    """f1, f0: [B, K]; w_t: [K, H] (transposed Linear weight); b: [H].

    Returns (emb1, emb0), each [B, H], equivalent to nn.Linear applied to f1 and f0.
    """
    B, K = f1.shape
    H = w_t.shape[1]

    # Fuse the two GEMVs into one kernel pass: single input slab, single output slab.
    x = jnp.concatenate([f1, f0], axis=0)  # [2B, K]
    b2d = b.reshape(1, H)

    flops = 2 * (2 * B) * K * H
    bytes_accessed = 4 * (2 * B * K + K * H + H + 2 * B * H)

    out = pl.pallas_call(
        _extractor_kernel,
        out_shape=jax.ShapeDtypeStruct((2 * B, H), jnp.float32),
        # Whole problem fits in one VMEM block (block_shape == full array dims), no grid.
        in_specs=[
            pl.BlockSpec((2 * B, K), lambda: (0, 0)),
            pl.BlockSpec((K, H), lambda: (0, 0)),
            pl.BlockSpec((1, H), lambda: (0, 0)),
        ],
        out_specs=pl.BlockSpec((2 * B, H), lambda: (0, 0)),
        cost_estimate=pl.CostEstimate(
            flops=flops, transcendentals=0, bytes_accessed=bytes_accessed
        ),
    )(x, w_t, b2d)

    return out[:B], out[B:]


if __name__ == "__main__":
    key = jax.random.PRNGKey(0)
    k_f1, k_f0, k_w, k_b = jax.random.split(key, 4)

    batch = 8
    in_features = 3
    hidden_dim = 32

    # Deterministic parameter init (same scheme as torch.nn.Linear: U(-1/sqrt(fan_in), +)).
    bound = 1.0 / (in_features ** 0.5)
    w = jax.random.uniform(k_w, (hidden_dim, in_features), jnp.float32, -bound, bound)
    b = jax.random.uniform(k_b, (hidden_dim,), jnp.float32, -bound, bound)
    w_t = w.T  # [3, hidden_dim]

    f1 = jax.random.normal(k_f1, (batch, in_features), jnp.float32)
    f0 = jax.random.normal(k_f0, (batch, in_features), jnp.float32)

    emb1, emb0 = extractor_forward(f1, f0, w_t, b)
    jax.block_until_ready((emb1, emb0))

    # Reference check against plain JAX.
    ref1 = f1 @ w_t + b
    ref0 = f0 @ w_t + b
    assert jnp.allclose(emb1, ref1, atol=1e-5), "emb1 mismatch"
    assert jnp.allclose(emb0, ref0, atol=1e-5), "emb0 mismatch"

    print("KERNEL_OK")
</pallas_src>

<mosaic_0001>
module attributes {stable_mosaic.version = 11 : i64} {
  func.func @_extractor_kernel(%arg0: memref<16x3xf32, #tpu.memory_space<vmem>>, %arg1: memref<3x32xf32, #tpu.memory_space<vmem>>, %arg2: memref<1x32xf32, #tpu.memory_space<vmem>>, %arg3: memref<16x32xf32, #tpu.memory_space<vmem>>) attributes {dimension_semantics = [], scalar_prefetch = 0 : i64, scratch_operands = 0 : i64, tpu.core_type = #tpu.core_type<tc>} {
    %c0 = arith.constant 0 : index
    %c0_0 = arith.constant 0 : index
    %0 = vector.load %arg0[%c0, %c0_0] : memref<16x3xf32, #tpu.memory_space<vmem>>, vector<16x3xf32>
    %c0_1 = arith.constant 0 : index
    %c0_2 = arith.constant 0 : index
    %1 = vector.load %arg1[%c0_1, %c0_2] : memref<3x32xf32, #tpu.memory_space<vmem>>, vector<3x32xf32>
    %c0_3 = arith.constant 0 : index
    %c0_4 = arith.constant 0 : index
    %2 = vector.load %arg2[%c0_3, %c0_4] : memref<1x32xf32, #tpu.memory_space<vmem>>, vector<1x32xf32>
    %3 = vector.extract_strided_slice %0 {offsets = [0, 0], sizes = [16, 1], strides = [1, 1]} : vector<16x3xf32> to vector<16x1xf32>
    %4 = vector.extract_strided_slice %1 {offsets = [0, 0], sizes = [1, 32], strides = [1, 1]} : vector<3x32xf32> to vector<1x32xf32>
    %5 = vector.broadcast %3 : vector<16x1xf32> to vector<16x32xf32>
    %6 = vector.broadcast %4 : vector<1x32xf32> to vector<16x32xf32>
    %7 = arith.mulf %5, %6 : vector<16x32xf32>
    %8 = vector.broadcast %2 : vector<1x32xf32> to vector<16x32xf32>
    %9 = arith.addf %8, %7 : vector<16x32xf32>
    %10 = vector.extract_strided_slice %0 {offsets = [0, 1], sizes = [16, 1], strides = [1, 1]} : vector<16x3xf32> to vector<16x1xf32>
    %11 = vector.extract_strided_slice %1 {offsets = [1, 0], sizes = [1, 32], strides = [1, 1]} : vector<3x32xf32> to vector<1x32xf32>
    %12 = vector.broadcast %10 : vector<16x1xf32> to vector<16x32xf32>
    %13 = vector.broadcast %11 : vector<1x32xf32> to vector<16x32xf32>
    %14 = arith.mulf %12, %13 : vector<16x32xf32>
    %15 = arith.addf %9, %14 : vector<16x32xf32>
    %16 = vector.extract_strided_slice %0 {offsets = [0, 2], sizes = [16, 1], strides = [1, 1]} : vector<16x3xf32> to vector<16x1xf32>
    %17 = vector.extract_strided_slice %1 {offsets = [2, 0], sizes = [1, 32], strides = [1, 1]} : vector<3x32xf32> to vector<1x32xf32>
    %18 = vector.broadcast %16 : vector<16x1xf32> to vector<16x32xf32>
    %19 = vector.broadcast %17 : vector<1x32xf32> to vector<16x32xf32>
    %20 = arith.mulf %18, %19 : vector<16x32xf32>
    %21 = arith.addf %15, %20 : vector<16x32xf32>
    %c0_5 = arith.constant 0 : index
    %c0_6 = arith.constant 0 : index
    %22 = vector.load %arg3[%c0_5, %c0_6] : memref<16x32xf32, #tpu.memory_space<vmem>>, vector<16x32xf32>
    tpu.vector_store %arg3[%c0_5, %c0_6], %21 {strides = array<i32>} : memref<16x32xf32, #tpu.memory_space<vmem>>, vector<16x32xf32>,
    return
  }
}

</mosaic_0001>

<llo_original>
// kernel: tpu_custom_call.1
$region0: #{tpu_custom_call.1}
  #allocation0 [shape = 'u32[]', space=smem, size = 0x4, offset = 0x4, fixed_abs, tag = 'smem constant byte address 0x4 - core index']
  #allocation1 [shape = 'u32[144,128]{1,0:T(1,128)}', space=vmem, size = 0x12000, scoped, tag = 'internal scratch']
  %s0 = inlined_call_operand.vmem [shape: f32[16,3], index: 0, kind: input, shape index: {}]
  %s1 = inlined_call_operand.vmem [shape: f32[3,32], index: 1, kind: input, shape index: {}]
  %s2 = inlined_call_operand.vmem [shape: f32[1,32], index: 2, kind: input, shape index: {}]
  %s3 = inlined_call_operand.hbm [shape: f32[16,32], index: 3, kind: output, shape index: {}]
  %s4 = sld [smem:[#allocation0]]
  $region22: #{tpu_custom_call.1} parent=0
    _
  %s6 = ssub.s32 1, %s4
  %s7 = scalar_select 0, %s6, %s4
  $region1: #{tpu_custom_call.1} parent=0
    #allocation2 [shape = 'u8[8192]{0}', space=vmem, size = 0x2000, scoped, tag = 'output window, operand 0, single buffered']
    #allocation3 [shape = 's32[1]{0}', space=sflag, size = 0x4, scoped, tag = 'scoped memory for tpu_custom_call.1']
    %8 = vsyncpa [#allocation3], 0
    // Predicated region
    $region2: #{tpu_custom_call.1} parent=1 // pred_check
      _
    $region3: #{tpu_custom_call.1} parent=1 // pred_check_branch
      %10 = sbr.rel (0) target = $region5
    $region4: #{tpu_custom_call.1} parent=1 // pred_region
      _
    $region5: #{tpu_custom_call.1} parent=1 // pred_fallthru
      _
    // Predicated region
    $region6: #{tpu_custom_call.1} parent=1 // pred_check
      _
    $region7: #{tpu_custom_call.1} parent=1 // pred_check_branch
      %12 = sbr.rel (0) target = $region9
    $region8: #{tpu_custom_call.1} parent=1 // pred_region
      _
    $region9: #{tpu_custom_call.1} parent=1 // pred_fallthru
      _
    // Predicated region
    $region10: #{tpu_custom_call.1} parent=1 // pred_check
      _
    $region11: #{tpu_custom_call.1} parent=1 // pred_check_branch
      %14 = sbr.rel (0) target = $region13
    $region12: #{tpu_custom_call.1} parent=1 // pred_region
      _
    $region13: #{tpu_custom_call.1} parent=1 // pred_fallthru
      _
    %v15 = vld [vmem:[%s0] sm:$0xff]
    %v16 = vld [vmem:[%s0 + $0x8] sm:$0xff]
    %v17 = vld [vmem:[%s1] sm:$0x7]
    %v18 = vld [vmem:[%s2] sm:$0x1]
    %20 = vset.pattern.permute.xlu0 0
    %21 = vperm.xlu0 %20, %v15
    %v22 = vpop.permute.xlu0 %21
    %25 = vset.pattern.permute.xlu0 0
    %26 = vperm.xlu0 %25, %v16
    %v27 = vpop.permute.xlu0 %26
    %v29 = vlaneseq
    %v30 = vshrl.u32 %v29, 7
    %v31 = vsub.s32 0, %v30
    %v32 = vrot.slane %v17, %v31
    %v33 = vmul.f32 %v22, %v32
    %v34 = vmul.f32 %v27, %v32
    %v36 = vlaneseq
    %v37 = vshrl.u32 %v36, 7
    %v38 = vsub.s32 0, %v37
    %v39 = vrot.slane %v18, %v38
    %v41 = vadd.f32 %v39, %v33
    %v42 = vadd.f32 %v39, %v34
    %43 = vset.pattern.permute.xlu0 1
    %44 = vperm.xlu0 %43, %v15
    %v45 = vpop.permute.xlu0 %44
    %47 = vset.pattern.permute.xlu0 1
    %48 = vperm.xlu0 %47, %v16
    %v49 = vpop.permute.xlu0 %48
    %v51 = vlaneseq
    %v52 = vshrl.u32 %v51, 7
    %v53 = vsub.s32 1, %v52
    %v54 = vrot.slane %v17, %v53
    %v55 = vmul.f32 %v45, %v54
    %v56 = vmul.f32 %v49, %v54
    %v57 = vadd.f32 %v41, %v55
    %v58 = vadd.f32 %v42, %v56
    %59 = vset.pattern.permute.xlu0 2
    %60 = vperm.xlu0 %59, %v15
    %v61 = vpop.permute.xlu0 %60
    %63 = vset.pattern.permute.xlu0 2
    %64 = vperm.xlu0 %63, %v16
    %v65 = vpop.permute.xlu0 %64
    %v67 = vlaneseq
    %v68 = vshrl.u32 %v67, 7
    %v69 = vsub.s32 2, %v68
    %v70 = vrot.slane %v17, %v69
    %v71 = vmul.f32 %v61, %v70
    %v72 = vmul.f32 %v65, %v70
    %v73 = vadd.f32 %v57, %v71
    %v74 = vadd.f32 %v58, %v72
    %vm75 = vcmask 261120
    %76 = vst.msk [vmem:[#allocation2] sm:$0xff] %vm75, %v73
    %77 = vst.msk [vmem:[#allocation2 + $0x8] sm:$0xff] %vm75, %v74
    // Predicated region
    $region14: #{tpu_custom_call.1} parent=1 // pred_check
      _
    $region15: #{tpu_custom_call.1} parent=1 // pred_check_branch
      %79 = sbr.rel (0) target = $region17
    $region16: #{tpu_custom_call.1} parent=1 // pred_region
      %s81 = ssub.s32 256, 256
      %82 = vsyncadd [#allocation3], %s81
      %s83 = sshll.u32 [#allocation2], 4
      %s84 = int_to_ptr.vmem [resolvable:$true] %s83
      %89 = dma.vmem_to_hbm [thread:$0]  %s84, 256, %s3, [#allocation3], 128, 128, 8
    $region17: #{tpu_custom_call.1} parent=1 // pred_fallthru
      _
    // Predicated region
    $region18: #{tpu_custom_call.1} parent=1 // pred_check
      _
    $region19: #{tpu_custom_call.1} parent=1 // pred_check_branch
      %91 = sbr.rel (0) target = $region21
    $region20: #{tpu_custom_call.1} parent=1 // pred_region
      %92 = dma.done [#allocation3], 256
    $region21: #{tpu_custom_call.1} parent=1 // pred_fallthru
      _
    %93 = vsyncpa [#allocation3], 1

</llo_original>
